<compile_context>
chip_gen: v6e
topology: v6e:2x2x1
jax: 0.10.0
libtpu: 0.0.40
codegen_flags: <defaults>
</compile_context>

<pallas_src>
import functools

import jax
import jax.numpy as jnp
from jax.experimental import pallas as pl
from jax.experimental.pallas import tpu as pltpu


def _round_up(a, m):
    return (a + m - 1) // m * m


def _tpu_vmem_bytes():
    try:
        return int(pltpu.get_tpu_info().vmem_capacity_bytes)
    except Exception:
        return 64 * 1024 * 1024  # conservative fallback (v7x per-TensorCore VMEM)


def _softmax_xent_kernel(x_ref, w_ref, b_ref, lab_ref, loss_ref, prec_ref,
                         loss_acc, corr_acc, *, n_valid, tile_n, tiles_per_core):
    c = pl.program_id(0)          # core-split axis ("parallel")
    i = pl.program_id(1)          # reduction over row tiles ("arbitrary")

    @pl.when(i == 0)
    def _init():
        loss_acc[...] = jnp.zeros_like(loss_acc)
        corr_acc[...] = jnp.zeros_like(corr_acc)

    # (tile_n, D)[bf16] @ (D, C_pad)[bf16] -> f32 accumulate on the MXU; bias is f32
    # so the -1e30 sentinel on padded classes is never bf16-rounded.
    logits = jnp.dot(x_ref[...], w_ref[...],
                     preferred_element_type=jnp.float32) + b_ref[...]
    tn, cp = logits.shape

    labels = lab_ref[...]                                          # (tile_n, 1) i32
    col = jax.lax.broadcasted_iota(jnp.int32, (1, cp), 1)          # (1, C_pad)
    onehot = col == labels                                         # -> (tile_n, C_pad)

    # Global row index of this (possibly ragged / spare) tile -> validity mask.
    row0 = (c * tiles_per_core + i) * tile_n
    row = row0 + jax.lax.broadcasted_iota(jnp.int32, (tn, 1), 0)
    valid = row < n_valid                                          # (tile_n, 1) bool

    # Numerically stable log-softmax; label logit gathered by the single compare.
    m = jnp.max(logits, axis=-1, keepdims=True)
    z = logits - m
    lse = jnp.log(jnp.sum(jnp.exp(z), axis=-1, keepdims=True))
    z_lab = jnp.sum(jnp.where(onehot, z, 0.0), axis=-1, keepdims=True)
    nll = lse - z_lab                                              # (tile_n, 1)

    # top-1 correct <=> label logit attains the row max (z_lab == 0). Differs from
    # torch.argmax only on exact float ties (measure zero).
    correct = z_lab >= 0.0

    # Per-row accumulation (VPU only). Undefined rows of partial boundary blocks are
    # where()-masked so garbage / NaN can never reach the accumulators.
    loss_acc[...] += jnp.where(valid, nll, 0.0)
    corr_acc[...] += jnp.where(jnp.logical_and(valid, correct), 1.0, 0.0)

    # One cross-sublane reduction per core, written as a lane-dense (1,1,128) block.
    @pl.when(i == tiles_per_core - 1)
    def _finalize():
        loss_ref[...] = jnp.full((1, 1, 128), jnp.sum(loss_acc[...]), jnp.float32)
        prec_ref[...] = jnp.full((1, 1, 128), jnp.sum(corr_acc[...]), jnp.float32)


def loss_function(x, label, weight, bias, *, tile_n=None,
                  compute_dtype=jnp.bfloat16):
    """x: (B, S, D), label: (B,) int, weight: (C, D) (nn.Linear layout), bias: (C,).
    Returns (loss, prec1) f32 scalars matching the PyTorch module's forward."""
    B, S, D = x.shape
    C = weight.shape[0]
    N = B * S
    assert N > 0

    itemsize = jnp.dtype(compute_dtype).itemsize
    C_pad = _round_up(C, 128)                     # lane-dense class dim

    # ---- operands: stream x (+labels); W^T / bias stay VMEM-resident -----------
    # x is only cast (no N pad, no D pad unless D is sublane-misaligned): no extra
    # HBM pass over the dominant operand; ragged tail handled in-kernel.
    x_flat = x.reshape(N, D)
    if D % 8 == 0:
        D_in = D
    else:
        D_in = _round_up(D, 8)
        x_flat = jnp.pad(x_flat, ((0, 0), (0, D_in - D)))
    x_flat = x_flat.astype(compute_dtype)
    labels = jnp.repeat(label.astype(jnp.int32), S).reshape(N, 1)  # repeat_interleave
    # One-time wrapper transpose of the loop-invariant weight -> (D_in, C_pad).
    w_t = jnp.pad(weight.astype(jnp.float32).T,
                  ((0, D_in - D), (0, C_pad - C))).astype(compute_dtype)
    # Padded classes: zero weight, -1e30 f32 bias -> never win max / add to LSE.
    b_pad = jnp.pad(bias.astype(jnp.float32), (0, C_pad - C),
                    constant_values=-1e30).reshape(1, C_pad)

    # ---- tile sizing: honest VMEM budget (resident weight counted) --------------
    vmem_cap = _tpu_vmem_bytes()
    resident = D_in * C_pad * itemsize + C_pad * 4          # weight + bias bytes
    if tile_n is None:
        budget = int(vmem_cap * 0.5) - 2 * resident         # 2x: worst-case buffering
        per_row = 2 * (D_in * itemsize + 4) + 4 * 4 * C_pad + 2 * 4
        tile_n = max(16, min(4096, (budget // max(per_row, 1)) // 16 * 16))
    tile_n = _round_up(min(max(int(tile_n), 16), max(16, _round_up(N, 16))), 16)

    num_tiles = -(-N // tile_n)
    n_cores = 2 if num_tiles >= 2 else 1                    # v7x dual-TC split
    tiles_per_core = -(-num_tiles // n_cores)

    kernel = functools.partial(_softmax_xent_kernel, n_valid=N, tile_n=tile_n,
                               tiles_per_core=tiles_per_core)

    def _tile_idx(c, i):
        # Clamp the (at most one) spare tile of the core split onto a valid block;
        # its rows fail the in-kernel global-row validity test and contribute 0.
        return jnp.minimum(c * tiles_per_core + i, num_tiles - 1)

    x_spec = pl.BlockSpec((tile_n, D_in), lambda c, i: (_tile_idx(c, i), 0))
    lab_spec = pl.BlockSpec((tile_n, 1), lambda c, i: (_tile_idx(c, i), 0))
    out_spec = pl.BlockSpec((1, 1, 128), lambda c, i: (c, 0, 0))

    def _resident_spec(shape, single_buffer):
        idx_map = lambda c, i: (0,) * len(shape)
        if single_buffer and hasattr(pl, "Buffered"):
            # Constant index_map needs no revolving buffer -> halve weight VMEM.
            return pl.BlockSpec(shape, idx_map, pipeline_mode=pl.Buffered(1))
        return pl.BlockSpec(shape, idx_map)

    cost = pl.CostEstimate(
        flops=2 * N * D_in * C_pad,
        transcendentals=N * C_pad + N,
        bytes_accessed=int(N * D_in * itemsize + D_in * C_pad * itemsize
                           + 4 * C_pad + 4 * N + 2 * n_cores * 128 * 4),
    )
    params = pltpu.CompilerParams(
        dimension_semantics=("parallel", "arbitrary"),
        vmem_limit_bytes=min(int(vmem_cap * 0.9), 128 * 1024 * 1024),
    )

    def _run(single_buffer_resident):
        grid_spec = pltpu.PrefetchScalarGridSpec(
            num_scalar_prefetch=0,
            grid=(n_cores, tiles_per_core),
            in_specs=[x_spec,
                      _resident_spec((D_in, C_pad), single_buffer_resident),
                      _resident_spec((1, C_pad), single_buffer_resident),
                      lab_spec],
            out_specs=[out_spec, out_spec],
            scratch_shapes=[pltpu.VMEM((tile_n, 1), jnp.float32),
                            pltpu.VMEM((tile_n, 1), jnp.float32)],
        )
        return pl.pallas_call(
            kernel,
            out_shape=(jax.ShapeDtypeStruct((n_cores, 1, 128), jnp.float32),
                       jax.ShapeDtypeStruct((n_cores, 1, 128), jnp.float32)),
            grid_spec=grid_spec,
            compiler_params=params,
            cost_estimate=cost,
        )(x_flat, w_t, b_pad, labels)

    try:
        loss_parts, corr_parts = _run(True)
    except Exception:   # pl.Buffered(1) unsupported on this jax/libtpu -> default buffering
        loss_parts, corr_parts = _run(False)

    # TODO(synk): for vocab-scale num_classes the resident W^T no longer fits VMEM
    # (v7x: 64 MiB); add a C-tiled online-LSE second grid axis before that point.
    inv_n = 1.0 / float(N)
    loss = jnp.sum(loss_parts[:, 0, 0]) * inv_n
    prec1 = jnp.sum(corr_parts[:, 0, 0]) * (100.0 * inv_n)
    return loss, prec1


def _reference(x, label, weight, bias, compute_dtype=jnp.float32):
    """Pure-JAX reference mirroring the PyTorch forward (same input rounding as the
    kernel's streaming dtype, f32 math)."""
    B, S, D = x.shape
    N = B * S
    xf = x.reshape(N, D).astype(compute_dtype).astype(jnp.float32)
    w = weight.astype(compute_dtype).astype(jnp.float32)
    lab = jnp.repeat(label, S)
    logits = xf @ w.T + bias.astype(jnp.float32)
    logp = jax.nn.log_softmax(logits, axis=-1)
    loss = -jnp.mean(logp[jnp.arange(N), lab])
    prec1 = 100.0 * jnp.mean((jnp.argmax(logits, axis=-1) == lab).astype(jnp.float32))
    return loss, prec1


def _run_case(key, B, S, D, C, tile_n=None):
    kx, kl, kw, kb = jax.random.split(key, 4)
    x = jax.random.normal(kx, (B, S, D), dtype=jnp.float32)
    label = jax.random.randint(kl, (B,), 0, C, dtype=jnp.int32)
    bound = 1.0 / (D ** 0.5)
    weight = jax.random.uniform(kw, (C, D), jnp.float32, -bound, bound)
    bias = jax.random.uniform(kb, (C,), jnp.float32, -bound, bound)

    loss, prec1 = loss_function(x, label, weight, bias, tile_n=tile_n)
    loss, prec1 = jax.block_until_ready((loss, prec1))

    ref_loss, ref_prec1 = _reference(x, label, weight, bias,
                                     compute_dtype=jnp.bfloat16)
    assert jnp.allclose(loss, ref_loss, atol=2e-3, rtol=1e-3), (loss, ref_loss)
    assert jnp.allclose(prec1, ref_prec1, atol=1e-3), (prec1, ref_prec1)


if __name__ == "__main__":
    key = jax.random.PRNGKey(0)
    k1, k2, k3 = jax.random.split(key, 3)

    # Shapes the module's forward implies: x (B, S, embedding_dim), label (B,)
    _run_case(k1, B=2, S=8, D=32, C=16)                    # aligned, single tile
    # Ragged rows (N=15) + misaligned D / C -> exercises padding + where-mask path
    _run_case(k2, B=3, S=5, D=20, C=7, tile_n=16)
    # Multi-tile + dual-core split with one clamped (masked-out) spare tile
    _run_case(k3, B=5, S=9, D=24, C=10, tile_n=16)

    print("KERNEL_OK")
</pallas_src>

<mosaic_0001>
module attributes {stable_mosaic.version = 11 : i64} {
  func.func @_softmax_xent_kernel(%arg0: i32, %arg1: i32, %arg2: memref<16x32xbf16, #tpu.memory_space<vmem>>, %arg3: memref<32x128xbf16, #tpu.memory_space<vmem>>, %arg4: memref<1x128xf32, #tpu.memory_space<vmem>>, %arg5: memref<16x1xi32, #tpu.memory_space<vmem>>, %arg6: memref<1x1x128xf32, #tpu.memory_space<vmem>>, %arg7: memref<1x1x128xf32, #tpu.memory_space<vmem>>, %arg8: memref<16x1xf32, #tpu.memory_space<vmem>>, %arg9: memref<16x1xf32, #tpu.memory_space<vmem>>) attributes {dimension_semantics = [#tpu.dimension_semantics<parallel>, #tpu.dimension_semantics<arbitrary>], iteration_bounds = array<i64: 1, 1>, scalar_prefetch = 0 : i64, scratch_operands = 2 : i64, tpu.core_type = #tpu.core_type<tc>, window_params = [{transform_indices = @transform_0, window_bounds = array<i64: 16, 32>}, {pipeline_mode = #tpu.pipeline_mode<synchronous>, transform_indices = @transform_1, window_bounds = array<i64: 32, 128>}, {pipeline_mode = #tpu.pipeline_mode<synchronous>, transform_indices = @transform_2, window_bounds = array<i64: 1, 128>}, {transform_indices = @transform_3, window_bounds = array<i64: 16, 1>}, {transform_indices = @transform_4, window_bounds = array<i64: 1, 1, 128>}, {transform_indices = @transform_5, window_bounds = array<i64: 1, 1, 128>}]} {
    %c0_i32 = arith.constant 0 : i32
    %0 = arith.cmpi eq, %arg1, %c0_i32 : i32
    %1 = arith.extui %0 : i1 to i32
    %c0_i32_0 = arith.constant 0 : i32
    %2 = arith.cmpi ne, %1, %c0_i32_0 : i32
    scf.if %2 {
      %cst_27 = arith.constant 0.000000e+00 : f32
      %52 = vector.broadcast %cst_27 : f32 to vector<16x1xf32>
      %c0_28 = arith.constant 0 : index
      %c0_29 = arith.constant 0 : index
      %53 = vector.load %arg8[%c0_28, %c0_29] : memref<16x1xf32, #tpu.memory_space<vmem>>, vector<16x1xf32>
      tpu.vector_store %arg8[%c0_28, %c0_29], %52 {strides = array<i32>} : memref<16x1xf32, #tpu.memory_space<vmem>>, vector<16x1xf32>,
      %cst_30 = arith.constant 0.000000e+00 : f32
      %54 = vector.broadcast %cst_30 : f32 to vector<16x1xf32>
      %c0_31 = arith.constant 0 : index
      %c0_32 = arith.constant 0 : index
      %55 = vector.load %arg9[%c0_31, %c0_32] : memref<16x1xf32, #tpu.memory_space<vmem>>, vector<16x1xf32>
      tpu.vector_store %arg9[%c0_31, %c0_32], %54 {strides = array<i32>} : memref<16x1xf32, #tpu.memory_space<vmem>>, vector<16x1xf32>,
    } else {
    }
    %c0 = arith.constant 0 : index
    %c0_1 = arith.constant 0 : index
    %3 = vector.load %arg2[%c0, %c0_1] : memref<16x32xbf16, #tpu.memory_space<vmem>>, vector<16x32xbf16>
    %c0_2 = arith.constant 0 : index
    %c0_3 = arith.constant 0 : index
    %4 = vector.load %arg3[%c0_2, %c0_3] : memref<32x128xbf16, #tpu.memory_space<vmem>>, vector<32x128xbf16>
    %cst = arith.constant dense<0.000000e+00> : vector<16x128xf32>
    %5 = tpu.matmul %3, %4, %cst {dimension_numbers = #tpu.dot_dimension_numbers<[1], [0], [0], [1], [0, 0, 1, 1], [], []>} : vector<16x32xbf16>, vector<32x128xbf16>, vector<16x128xf32> -> vector<16x128xf32>
    %c0_4 = arith.constant 0 : index
    %c0_5 = arith.constant 0 : index
    %6 = vector.load %arg4[%c0_4, %c0_5] : memref<1x128xf32, #tpu.memory_space<vmem>>, vector<1x128xf32>
    %7 = vector.broadcast %6 : vector<1x128xf32> to vector<16x128xf32>
    %8 = arith.addf %5, %7 : vector<16x128xf32>
    %c0_6 = arith.constant 0 : index
    %c0_7 = arith.constant 0 : index
    %9 = vector.load %arg5[%c0_6, %c0_7] : memref<16x1xi32, #tpu.memory_space<vmem>>, vector<16x1xi32>
    %10 = tpu.iota {dimensions = array<i32: 1>} : vector<1x128xi32>
    %11 = vector.broadcast %10 : vector<1x128xi32> to vector<16x128xi32>
    %12 = vector.broadcast %9 : vector<16x1xi32> to vector<16x128xi32>
    %13 = arith.cmpi eq, %11, %12 : vector<16x128xi32>
    %c1_i32 = arith.constant 1 : i32
    %14 = arith.muli %arg0, %c1_i32 : i32
    %15 = arith.addi %14, %arg1 : i32
    %c16_i32 = arith.constant 16 : i32
    %16 = arith.muli %15, %c16_i32 : i32
    %17 = tpu.iota {dimensions = array<i32: 0>} : vector<16x1xi32>
    %18 = vector.broadcast %16 : i32 to vector<16x1xi32>
    %19 = arith.addi %18, %17 : vector<16x1xi32>
    %c16_i32_8 = arith.constant 16 : i32
    %20 = vector.broadcast %c16_i32_8 : i32 to vector<16x1xi32>
    %21 = arith.cmpi slt, %19, %20 : vector<16x1xi32>
    %cst_9 = arith.constant dense<0xFF800000> : vector<16xf32>
    %22 = vector.multi_reduction <maximumf>, %8, %cst_9 [1] : vector<16x128xf32> to vector<16xf32>
    %23 = vector.shape_cast %22 : vector<16xf32> to vector<16x1xf32>
    %24 = vector.broadcast %23 : vector<16x1xf32> to vector<16x128xf32>
    %25 = arith.subf %8, %24 : vector<16x128xf32>
    %26 = math.exp %25 : vector<16x128xf32>
    %cst_10 = arith.constant dense<0.000000e+00> : vector<16xf32>
    %27 = vector.multi_reduction <add>, %26, %cst_10 [1] : vector<16x128xf32> to vector<16xf32>
    %28 = vector.shape_cast %27 : vector<16xf32> to vector<16x1xf32>
    %29 = math.log %28 : vector<16x1xf32>
    %cst_11 = arith.constant 0.000000e+00 : f32
    %30 = vector.broadcast %cst_11 : f32 to vector<16x128xf32>
    %31 = arith.select %13, %25, %30 : vector<16x128xi1>, vector<16x128xf32>
    %cst_12 = arith.constant dense<0.000000e+00> : vector<16xf32>
    %32 = vector.multi_reduction <add>, %31, %cst_12 [1] : vector<16x128xf32> to vector<16xf32>
    %33 = vector.shape_cast %32 : vector<16xf32> to vector<16x1xf32>
    %34 = arith.subf %29, %33 : vector<16x1xf32>
    %cst_13 = arith.constant 0.000000e+00 : f32
    %35 = vector.broadcast %cst_13 : f32 to vector<16x1xf32>
    %36 = arith.cmpf oge, %33, %35 : vector<16x1xf32>
    %c0_14 = arith.constant 0 : index
    %c0_15 = arith.constant 0 : index
    %37 = vector.load %arg8[%c0_14, %c0_15] : memref<16x1xf32, #tpu.memory_space<vmem>>, vector<16x1xf32>
    %cst_16 = arith.constant 0.000000e+00 : f32
    %38 = vector.broadcast %cst_16 : f32 to vector<16x1xf32>
    %39 = arith.select %21, %34, %38 : vector<16x1xi1>, vector<16x1xf32>
    %40 = arith.addf %37, %39 : vector<16x1xf32>
    %c0_17 = arith.constant 0 : index
    %c0_18 = arith.constant 0 : index
    %41 = vector.load %arg8[%c0_17, %c0_18] : memref<16x1xf32, #tpu.memory_space<vmem>>, vector<16x1xf32>
    tpu.vector_store %arg8[%c0_17, %c0_18], %40 {strides = array<i32>} : memref<16x1xf32, #tpu.memory_space<vmem>>, vector<16x1xf32>,
    %c0_19 = arith.constant 0 : index
    %c0_20 = arith.constant 0 : index
    %42 = vector.load %arg9[%c0_19, %c0_20] : memref<16x1xf32, #tpu.memory_space<vmem>>, vector<16x1xf32>
    %43 = arith.andi %21, %36 : vector<16x1xi1>
    %cst_21 = arith.constant 1.000000e+00 : f32
    %cst_22 = arith.constant 0.000000e+00 : f32
    %44 = vector.broadcast %cst_21 : f32 to vector<16x1xf32>
    %45 = vector.broadcast %cst_22 : f32 to vector<16x1xf32>
    %46 = arith.select %43, %44, %45 : vector<16x1xi1>, vector<16x1xf32>
    %47 = arith.addf %42, %46 : vector<16x1xf32>
    %c0_23 = arith.constant 0 : index
    %c0_24 = arith.constant 0 : index
    %48 = vector.load %arg9[%c0_23, %c0_24] : memref<16x1xf32, #tpu.memory_space<vmem>>, vector<16x1xf32>
    tpu.vector_store %arg9[%c0_23, %c0_24], %47 {strides = array<i32>} : memref<16x1xf32, #tpu.memory_space<vmem>>, vector<16x1xf32>,
    %c0_i32_25 = arith.constant 0 : i32
    %49 = arith.cmpi eq, %arg1, %c0_i32_25 : i32
    %50 = arith.extui %49 : i1 to i32
    %c0_i32_26 = arith.constant 0 : i32
    %51 = arith.cmpi ne, %50, %c0_i32_26 : i32
    scf.if %51 {
      %c0_27 = arith.constant 0 : index
      %c0_28 = arith.constant 0 : index
      %52 = vector.load %arg8[%c0_27, %c0_28] : memref<16x1xf32, #tpu.memory_space<vmem>>, vector<16x1xf32>
      %53 = vector.shape_cast %52 : vector<16x1xf32> to vector<1x16x1xf32>
      %cst_29 = arith.constant dense<0.000000e+00> : vector<1xf32>
      %54 = vector.multi_reduction <add>, %53, %cst_29 [1, 2] : vector<1x16x1xf32> to vector<1xf32>
      %55 = vector.shape_cast %54 : vector<1xf32> to vector<1x1x1xf32>
      %56 = vector.extract %55[0, 0, 0] : f32 from vector<1x1x1xf32>
      %57 = vector.broadcast %56 : f32 to vector<1x1x128xf32>
      %c0_30 = arith.constant 0 : index
      %c0_31 = arith.constant 0 : index
      %c0_32 = arith.constant 0 : index
      %58 = vector.load %arg6[%c0_30, %c0_31, %c0_32] : memref<1x1x128xf32, #tpu.memory_space<vmem>>, vector<1x1x128xf32>
      tpu.vector_store %arg6[%c0_30, %c0_31, %c0_32], %57 {strides = array<i32>} : memref<1x1x128xf32, #tpu.memory_space<vmem>>, vector<1x1x128xf32>,
      %c0_33 = arith.constant 0 : index
      %c0_34 = arith.constant 0 : index
      %59 = vector.load %arg9[%c0_33, %c0_34] : memref<16x1xf32, #tpu.memory_space<vmem>>, vector<16x1xf32>
      %60 = vector.shape_cast %59 : vector<16x1xf32> to vector<1x16x1xf32>
      %cst_35 = arith.constant dense<0.000000e+00> : vector<1xf32>
      %61 = vector.multi_reduction <add>, %60, %cst_35 [1, 2] : vector<1x16x1xf32> to vector<1xf32>
      %62 = vector.shape_cast %61 : vector<1xf32> to vector<1x1x1xf32>
      %63 = vector.extract %62[0, 0, 0] : f32 from vector<1x1x1xf32>
      %64 = vector.broadcast %63 : f32 to vector<1x1x128xf32>
      %c0_36 = arith.constant 0 : index
      %c0_37 = arith.constant 0 : index
      %c0_38 = arith.constant 0 : index
      %65 = vector.load %arg7[%c0_36, %c0_37, %c0_38] : memref<1x1x128xf32, #tpu.memory_space<vmem>>, vector<1x1x128xf32>
      tpu.vector_store %arg7[%c0_36, %c0_37, %c0_38], %64 {strides = array<i32>} : memref<1x1x128xf32, #tpu.memory_space<vmem>>, vector<1x1x128xf32>,
    } else {
    }
    return
  }
  func.func @transform_0(%arg0: i32, %arg1: i32) -> (i32, i32) {
    %c1_i32 = arith.constant 1 : i32
    %0 = arith.muli %arg0, %c1_i32 : i32
    %1 = arith.addi %0, %arg1 : i32
    %c0_i32 = arith.constant 0 : i32
    %2 = arith.minsi %1, %c0_i32 : i32
    %c0_i32_0 = arith.constant 0 : i32
    %c0_i32_1 = arith.constant 0 : i32
    return %2, %c0_i32_0 : i32, i32
  }
  func.func @transform_1(%arg0: i32, %arg1: i32) -> (i32, i32) {
    %c0_i32 = arith.constant 0 : i32
    %c0_i32_0 = arith.constant 0 : i32
    %c0_i32_1 = arith.constant 0 : i32
    return %c0_i32, %c0_i32_0 : i32, i32
  }
  func.func @transform_2(%arg0: i32, %arg1: i32) -> (i32, i32) {
    %c0_i32 = arith.constant 0 : i32
    %c0_i32_0 = arith.constant 0 : i32
    %c0_i32_1 = arith.constant 0 : i32
    return %c0_i32, %c0_i32_0 : i32, i32
  }
  func.func @transform_3(%arg0: i32, %arg1: i32) -> (i32, i32) {
    %c1_i32 = arith.constant 1 : i32
    %0 = arith.muli %arg0, %c1_i32 : i32
    %1 = arith.addi %0, %arg1 : i32
    %c0_i32 = arith.constant 0 : i32
    %2 = arith.minsi %1, %c0_i32 : i32
    %c0_i32_0 = arith.constant 0 : i32
    %c0_i32_1 = arith.constant 0 : i32
    return %2, %c0_i32_0 : i32, i32
  }
  func.func @transform_4(%arg0: i32, %arg1: i32) -> (i32, i32, i32) {
    %c0_i32 = arith.constant 0 : i32
    %c0_i32_0 = arith.constant 0 : i32
    %c0_i32_1 = arith.constant 0 : i32
    return %arg0, %c0_i32, %c0_i32_0 : i32, i32, i32
  }
  func.func @transform_5(%arg0: i32, %arg1: i32) -> (i32, i32, i32) {
    %c0_i32 = arith.constant 0 : i32
    %c0_i32_0 = arith.constant 0 : i32
    %c0_i32_1 = arith.constant 0 : i32
    return %arg0, %c0_i32, %c0_i32_0 : i32, i32, i32
  }
}

module attributes {stable_mosaic.version = 11 : i64} {
  func.func @_softmax_xent_kernel(%arg0: i32, %arg1: i32, %arg2: memref<16x32xbf16, #tpu.memory_space<vmem>>, %arg3: memref<32x128xbf16, #tpu.memory_space<vmem>>, %arg4: memref<1x128xf32, #tpu.memory_space<vmem>>, %arg5: memref<16x1xi32, #tpu.memory_space<vmem>>, %arg6: memref<1x1x128xf32, #tpu.memory_space<vmem>>, %arg7: memref<1x1x128xf32, #tpu.memory_space<vmem>>, %arg8: memref<16x1xf32, #tpu.memory_space<vmem>>, %arg9: memref<16x1xf32, #tpu.memory_space<vmem>>) attributes {dimension_semantics = [#tpu.dimension_semantics<parallel>, #tpu.dimension_semantics<arbitrary>], iteration_bounds = array<i64: 1, 1>, scalar_prefetch = 0 : i64, scratch_operands = 2 : i64, tpu.core_type = #tpu.core_type<tc>, window_params = [{transform_indices = @transform_0, window_bounds = array<i64: 16, 32>}, {pipeline_mode = #tpu.pipeline_mode<synchronous>, transform_indices = @transform_1, window_bounds = array<i64: 32, 128>}, {pipeline_mode = #tpu.pipeline_mode<synchronous>, transform_indices = @transform_2, window_bounds = array<i64: 1, 128>}, {transform_indices = @transform_3, window_bounds = array<i64: 16, 1>}, {transform_indices = @transform_4, window_bounds = array<i64: 1, 1, 128>}, {transform_indices = @transform_5, window_bounds = array<i64: 1, 1, 128>}]} {
    %c0_i32 = arith.constant 0 : i32
    %0 = arith.cmpi eq, %arg1, %c0_i32 : i32
    %1 = arith.extui %0 : i1 to i32
    %c0_i32_0 = arith.constant 0 : i32
    %2 = arith.cmpi ne, %1, %c0_i32_0 : i32
    scf.if %2 {
      %cst_27 = arith.constant 0.000000e+00 : f32
      %52 = vector.broadcast %cst_27 : f32 to vector<16x1xf32>
      %c0_28 = arith.constant 0 : index
      %c0_29 = arith.constant 0 : index
      %53 = vector.load %arg8[%c0_28, %c0_29] : memref<16x1xf32, #tpu.memory_space<vmem>>, vector<16x1xf32>
      tpu.vector_store %arg8[%c0_28, %c0_29], %52 {strides = array<i32>} : memref<16x1xf32, #tpu.memory_space<vmem>>, vector<16x1xf32>,
      %cst_30 = arith.constant 0.000000e+00 : f32
      %54 = vector.broadcast %cst_30 : f32 to vector<16x1xf32>
      %c0_31 = arith.constant 0 : index
      %c0_32 = arith.constant 0 : index
      %55 = vector.load %arg9[%c0_31, %c0_32] : memref<16x1xf32, #tpu.memory_space<vmem>>, vector<16x1xf32>
      tpu.vector_store %arg9[%c0_31, %c0_32], %54 {strides = array<i32>} : memref<16x1xf32, #tpu.memory_space<vmem>>, vector<16x1xf32>,
    } else {
    }
    %c0 = arith.constant 0 : index
    %c0_1 = arith.constant 0 : index
    %3 = vector.load %arg2[%c0, %c0_1] : memref<16x32xbf16, #tpu.memory_space<vmem>>, vector<16x32xbf16>
    %c0_2 = arith.constant 0 : index
    %c0_3 = arith.constant 0 : index
    %4 = vector.load %arg3[%c0_2, %c0_3] : memref<32x128xbf16, #tpu.memory_space<vmem>>, vector<32x128xbf16>
    %cst = arith.constant dense<0.000000e+00> : vector<16x128xf32>
    %5 = tpu.matmul %3, %4, %cst {dimension_numbers = #tpu.dot_dimension_numbers<[1], [0], [0], [1], [0, 0, 1, 1], [], []>} : vector<16x32xbf16>, vector<32x128xbf16>, vector<16x128xf32> -> vector<16x128xf32>
    %c0_4 = arith.constant 0 : index
    %c0_5 = arith.constant 0 : index
    %6 = vector.load %arg4[%c0_4, %c0_5] : memref<1x128xf32, #tpu.memory_space<vmem>>, vector<1x128xf32>
    %7 = vector.broadcast %6 : vector<1x128xf32> to vector<16x128xf32>
    %8 = arith.addf %5, %7 : vector<16x128xf32>
    %c0_6 = arith.constant 0 : index
    %c0_7 = arith.constant 0 : index
    %9 = vector.load %arg5[%c0_6, %c0_7] : memref<16x1xi32, #tpu.memory_space<vmem>>, vector<16x1xi32>
    %10 = tpu.iota {dimensions = array<i32: 1>} : vector<1x128xi32>
    %11 = vector.broadcast %10 : vector<1x128xi32> to vector<16x128xi32>
    %12 = vector.broadcast %9 : vector<16x1xi32> to vector<16x128xi32>
    %13 = arith.cmpi eq, %11, %12 : vector<16x128xi32>
    %c1_i32 = arith.constant 1 : i32
    %14 = arith.muli %arg0, %c1_i32 : i32
    %15 = arith.addi %14, %arg1 : i32
    %c16_i32 = arith.constant 16 : i32
    %16 = arith.muli %15, %c16_i32 : i32
    %17 = tpu.iota {dimensions = array<i32: 0>} : vector<16x1xi32>
    %18 = vector.broadcast %16 : i32 to vector<16x1xi32>
    %19 = arith.addi %18, %17 : vector<16x1xi32>
    %c16_i32_8 = arith.constant 16 : i32
    %20 = vector.broadcast %c16_i32_8 : i32 to vector<16x1xi32>
    %21 = arith.cmpi slt, %19, %20 : vector<16x1xi32>
    %cst_9 = arith.constant dense<0xFF800000> : vector<16xf32>
    %22 = vector.multi_reduction <maximumf>, %8, %cst_9 [1] : vector<16x128xf32> to vector<16xf32>
    %23 = vector.shape_cast %22 : vector<16xf32> to vector<16x1xf32>
    %24 = vector.broadcast %23 : vector<16x1xf32> to vector<16x128xf32>
    %25 = arith.subf %8, %24 : vector<16x128xf32>
    %26 = math.exp %25 : vector<16x128xf32>
    %cst_10 = arith.constant dense<0.000000e+00> : vector<16xf32>
    %27 = vector.multi_reduction <add>, %26, %cst_10 [1] : vector<16x128xf32> to vector<16xf32>
    %28 = vector.shape_cast %27 : vector<16xf32> to vector<16x1xf32>
    %29 = math.log %28 : vector<16x1xf32>
    %cst_11 = arith.constant 0.000000e+00 : f32
    %30 = vector.broadcast %cst_11 : f32 to vector<16x128xf32>
    %31 = arith.select %13, %25, %30 : vector<16x128xi1>, vector<16x128xf32>
    %cst_12 = arith.constant dense<0.000000e+00> : vector<16xf32>
    %32 = vector.multi_reduction <add>, %31, %cst_12 [1] : vector<16x128xf32> to vector<16xf32>
    %33 = vector.shape_cast %32 : vector<16xf32> to vector<16x1xf32>
    %34 = arith.subf %29, %33 : vector<16x1xf32>
    %cst_13 = arith.constant 0.000000e+00 : f32
    %35 = vector.broadcast %cst_13 : f32 to vector<16x1xf32>
    %36 = arith.cmpf oge, %33, %35 : vector<16x1xf32>
    %c0_14 = arith.constant 0 : index
    %c0_15 = arith.constant 0 : index
    %37 = vector.load %arg8[%c0_14, %c0_15] : memref<16x1xf32, #tpu.memory_space<vmem>>, vector<16x1xf32>
    %cst_16 = arith.constant 0.000000e+00 : f32
    %38 = vector.broadcast %cst_16 : f32 to vector<16x1xf32>
    %39 = arith.select %21, %34, %38 : vector<16x1xi1>, vector<16x1xf32>
    %40 = arith.addf %37, %39 : vector<16x1xf32>
    %c0_17 = arith.constant 0 : index
    %c0_18 = arith.constant 0 : index
    %41 = vector.load %arg8[%c0_17, %c0_18] : memref<16x1xf32, #tpu.memory_space<vmem>>, vector<16x1xf32>
    tpu.vector_store %arg8[%c0_17, %c0_18], %40 {strides = array<i32>} : memref<16x1xf32, #tpu.memory_space<vmem>>, vector<16x1xf32>,
    %c0_19 = arith.constant 0 : index
    %c0_20 = arith.constant 0 : index
    %42 = vector.load %arg9[%c0_19, %c0_20] : memref<16x1xf32, #tpu.memory_space<vmem>>, vector<16x1xf32>
    %43 = arith.andi %21, %36 : vector<16x1xi1>
    %cst_21 = arith.constant 1.000000e+00 : f32
    %cst_22 = arith.constant 0.000000e+00 : f32
    %44 = vector.broadcast %cst_21 : f32 to vector<16x1xf32>
    %45 = vector.broadcast %cst_22 : f32 to vector<16x1xf32>
    %46 = arith.select %43, %44, %45 : vector<16x1xi1>, vector<16x1xf32>
    %47 = arith.addf %42, %46 : vector<16x1xf32>
    %c0_23 = arith.constant 0 : index
    %c0_24 = arith.constant 0 : index
    %48 = vector.load %arg9[%c0_23, %c0_24] : memref<16x1xf32, #tpu.memory_space<vmem>>, vector<16x1xf32>
    tpu.vector_store %arg9[%c0_23, %c0_24], %47 {strides = array<i32>} : memref<16x1xf32, #tpu.memory_space<vmem>>, vector<16x1xf32>,
    %c0_i32_25 = arith.constant 0 : i32
    %49 = arith.cmpi eq, %arg1, %c0_i32_25 : i32
    %50 = arith.extui %49 : i1 to i32
    %c0_i32_26 = arith.constant 0 : i32
    %51 = arith.cmpi ne, %50, %c0_i32_26 : i32
    scf.if %51 {
      %c0_27 = arith.constant 0 : index
      %c0_28 = arith.constant 0 : index
      %52 = vector.load %arg8[%c0_27, %c0_28] : memref<16x1xf32, #tpu.memory_space<vmem>>, vector<16x1xf32>
      %53 = vector.shape_cast %52 : vector<16x1xf32> to vector<1x16x1xf32>
      %cst_29 = arith.constant dense<0.000000e+00> : vector<1xf32>
      %54 = vector.multi_reduction <add>, %53, %cst_29 [1, 2] : vector<1x16x1xf32> to vector<1xf32>
      %55 = vector.shape_cast %54 : vector<1xf32> to vector<1x1x1xf32>
      %56 = vector.extract %55[0, 0, 0] : f32 from vector<1x1x1xf32>
      %57 = vector.broadcast %56 : f32 to vector<1x1x128xf32>
      %c0_30 = arith.constant 0 : index
      %c0_31 = arith.constant 0 : index
      %c0_32 = arith.constant 0 : index
      %58 = vector.load %arg6[%c0_30, %c0_31, %c0_32] : memref<1x1x128xf32, #tpu.memory_space<vmem>>, vector<1x1x128xf32>
      tpu.vector_store %arg6[%c0_30, %c0_31, %c0_32], %57 {strides = array<i32>} : memref<1x1x128xf32, #tpu.memory_space<vmem>>, vector<1x1x128xf32>,
      %c0_33 = arith.constant 0 : index
      %c0_34 = arith.constant 0 : index
      %59 = vector.load %arg9[%c0_33, %c0_34] : memref<16x1xf32, #tpu.memory_space<vmem>>, vector<16x1xf32>
      %60 = vector.shape_cast %59 : vector<16x1xf32> to vector<1x16x1xf32>
      %cst_35 = arith.constant dense<0.000000e+00> : vector<1xf32>
      %61 = vector.multi_reduction <add>, %60, %cst_35 [1, 2] : vector<1x16x1xf32> to vector<1xf32>
      %62 = vector.shape_cast %61 : vector<1xf32> to vector<1x1x1xf32>
      %63 = vector.extract %62[0, 0, 0] : f32 from vector<1x1x1xf32>
      %64 = vector.broadcast %63 : f32 to vector<1x1x128xf32>
      %c0_36 = arith.constant 0 : index
      %c0_37 = arith.constant 0 : index
      %c0_38 = arith.constant 0 : index
      %65 = vector.load %arg7[%c0_36, %c0_37, %c0_38] : memref<1x1x128xf32, #tpu.memory_space<vmem>>, vector<1x1x128xf32>
      tpu.vector_store %arg7[%c0_36, %c0_37, %c0_38], %64 {strides = array<i32>} : memref<1x1x128xf32, #tpu.memory_space<vmem>>, vector<1x1x128xf32>,
    } else {
    }
    return
  }
  func.func @transform_0(%arg0: i32, %arg1: i32) -> (i32, i32) {
    %c1_i32 = arith.constant 1 : i32
    %0 = arith.muli %arg0, %c1_i32 : i32
    %1 = arith.addi %0, %arg1 : i32
    %c0_i32 = arith.constant 0 : i32
    %2 = arith.minsi %1, %c0_i32 : i32
    %c0_i32_0 = arith.constant 0 : i32
    %c0_i32_1 = arith.constant 0 : i32
    return %2, %c0_i32_0 : i32, i32
  }
  func.func @transform_1(%arg0: i32, %arg1: i32) -> (i32, i32) {
    %c0_i32 = arith.constant 0 : i32
    %c0_i32_0 = arith.constant 0 : i32
    %c0_i32_1 = arith.constant 0 : i32
    return %c0_i32, %c0_i32_0 : i32, i32
  }
  func.func @transform_2(%arg0: i32, %arg1: i32) -> (i32, i32) {
    %c0_i32 = arith.constant 0 : i32
    %c0_i32_0 = arith.constant 0 : i32
    %c0_i32_1 = arith.constant 0 : i32
    return %c0_i32, %c0_i32_0 : i32, i32
  }
  func.func @transform_3(%arg0: i32, %arg1: i32) -> (i32, i32) {
    %c1_i32 = arith.constant 1 : i32
    %0 = arith.muli %arg0, %c1_i32 : i32
    %1 = arith.addi %0, %arg1 : i32
    %c0_i32 = arith.constant 0 : i32
    %2 = arith.minsi %1, %c0_i32 : i32
    %c0_i32_0 = arith.constant 0 : i32
    %c0_i32_1 = arith.constant 0 : i32
    return %2, %c0_i32_0 : i32, i32
  }
  func.func @transform_4(%arg0: i32, %arg1: i32) -> (i32, i32, i32) {
    %c0_i32 = arith.constant 0 : i32
    %c0_i32_0 = arith.constant 0 : i32
    %c0_i32_1 = arith.constant 0 : i32
    return %arg0, %c0_i32, %c0_i32_0 : i32, i32, i32
  }
  func.func @transform_5(%arg0: i32, %arg1: i32) -> (i32, i32, i32) {
    %c0_i32 = arith.constant 0 : i32
    %c0_i32_0 = arith.constant 0 : i32
    %c0_i32_1 = arith.constant 0 : i32
    return %arg0, %c0_i32, %c0_i32_0 : i32, i32, i32
  }
}

</mosaic_0001>

<llo_original>
// kernel: tpu_custom_call.1
$region0: #{tpu_custom_call.1}
  #allocation0 [shape = 'u32[]', space=smem, size = 0x4, offset = 0x4, fixed_abs, tag = 'smem constant byte address 0x4 - core index']
  #allocation1 [shape = 'u32[144,128]{1,0:T(1,128)}', space=vmem, size = 0x12000, scoped, tag = 'internal scratch']
  #allocation2 [shape = 'f32[16,1]{1,0:T(8,128)}', space=vmem, size = 0x2000, scoped, tag = 'scratch operand']
  #allocation3 [shape = 'f32[16,1]{1,0:T(8,128)}', space=vmem, size = 0x2000, scoped, tag = 'scratch operand']
  %s0 = inlined_call_operand.hbm [shape: bf16[16,32], index: 0, kind: input, shape index: {}]
  %s1 = inlined_call_operand.vmem [shape: bf16[32,128], index: 1, kind: input, shape index: {}]
  %s2 = inlined_call_operand.vmem [shape: f32[1,128], index: 2, kind: input, shape index: {}]
  %s3 = inlined_call_operand.vmem [shape: s32[16,1], index: 3, kind: input, shape index: {}]
  %s4 = inlined_call_operand.hbm [shape: f32[1,1,128], index: 4, kind: output, shape index: {0}]
  %s5 = inlined_call_operand.hbm [shape: f32[1,1,128], index: 5, kind: output, shape index: {1}]
  %6 = xla_tuple %s4, %s5
  %s7 = sld [smem:[#allocation0]]
  $region46: #{tpu_custom_call.1} parent=0
    _
  %s9 = ssub.s32 1, %s7
  %s10 = scalar_select 0, %s9, %s7
  $region1: #{tpu_custom_call.1} parent=0
    #allocation4 [shape = 'u8[4096]{0}', space=vmem, size = 0x1000, scoped, tag = 'input window, operand 0, single buffered']
    #allocation5 [shape = 's32[1]{0}', space=sflag, size = 0x4, scoped, tag = 'scoped memory for tpu_custom_call.1']
    #allocation6 [shape = 's32[1]{0}', space=sflag, size = 0x4, scoped, tag = 'scoped memory for tpu_custom_call.1']
    #allocation7 [shape = 'u8[512]{0}', space=vmem, size = 0x400, scoped, tag = 'output window, operand 0, single buffered']
    #allocation8 [shape = 'u8[512]{0}', space=vmem, size = 0x400, scoped, tag = 'output window, operand 1, single buffered']
    #allocation9 [shape = 's32[1]{0}', space=sflag, size = 0x4, scoped, tag = 'scoped memory for tpu_custom_call.1']
    %11 = vsyncpa [#allocation5], 0
    %12 = vsyncpa [#allocation6], 0
    %13 = vsyncpa [#allocation9], 0
    // Predicated region
    $region2: #{tpu_custom_call.1} parent=1 // pred_check
      _
    $region3: #{tpu_custom_call.1} parent=1 // pred_check_branch
      %15 = sbr.rel (0) target = $region5
    $region4: #{tpu_custom_call.1} parent=1 // pred_region
      %s16 = sadd.s32 0, 0
      %p17 = scmp.lt.s32.totalorder %s16, 0
      %s18 = scalar_select %p17, %s16, 0
      %s19 = smul.u32 2, %s18
      %s21 = ssub.s32 128, 128
      %22 = vsyncadd [#allocation5], %s21
      %s23 = smul.addr %s19, 64
      %s24 = scalar_lea.hbm %s0, %s23
      %s25 = sshll.u32 [#allocation4], 4
      %s26 = int_to_ptr.vmem [resolvable:$true] %s25
      %31 = dma.hbm_to_vmem [thread:$0]  %s24, 128, %s26, [#allocation5], 64, 64, 4
    $region5: #{tpu_custom_call.1} parent=1 // pred_fallthru
      _
    // Predicated region
    $region6: #{tpu_custom_call.1} parent=1 // pred_check
      _
    $region7: #{tpu_custom_call.1} parent=1 // pred_check_branch
      %33 = sbr.rel (0) target = $region9
    $region8: #{tpu_custom_call.1} parent=1 // pred_region
      _
    $region9: #{tpu_custom_call.1} parent=1 // pred_fallthru
      _
    // Predicated region
    $region10: #{tpu_custom_call.1} parent=1 // pred_check
      _
    $region11: #{tpu_custom_call.1} parent=1 // pred_check_branch
      %35 = sbr.rel (0) target = $region13
    $region12: #{tpu_custom_call.1} parent=1 // pred_region
      _
    $region13: #{tpu_custom_call.1} parent=1 // pred_fallthru
      _
    // Predicated region
    $region14: #{tpu_custom_call.1} parent=1 // pred_check
      _
    $region15: #{tpu_custom_call.1} parent=1 // pred_check_branch
      %37 = sbr.rel (0) target = $region17
    $region16: #{tpu_custom_call.1} parent=1 // pred_region
      %s38 = sadd.s32 0, 0
      %p39 = scmp.lt.s32.totalorder %s38, 0
      %s40 = scalar_select %p39, %s38, 0
      %s41 = smul.u32 2, %s40
      %p42 = scmp.lt.s32.totalorder %s41, 1
      %s43 = scalar_select %p42, %s41, 1
      %s44 = smul.addr %s43, 8
      %s45 = scalar_lea.vmem %s3, %s44
      %s46 = sadd.s32 0, 0
      %p47 = scmp.lt.s32.totalorder %s46, 0
      %s48 = scalar_select %p47, %s46, 0
      %s49 = smul.u32 2, %s48
    $region17: #{tpu_custom_call.1} parent=1 // pred_fallthru
      _
    // Predicated region
    $region18: #{tpu_custom_call.1} parent=1 // pred_check
      _
    $region19: #{tpu_custom_call.1} parent=1 // pred_check_branch
      %51 = sbr.rel (0) target = $region21
    $region20: #{tpu_custom_call.1} parent=1 // pred_region
      %52 = dma.done [#allocation5], 128
    $region21: #{tpu_custom_call.1} parent=1 // pred_fallthru
      _
    %s53 = sadd.s32 0, 0
    %p54 = scmp.lt.s32.totalorder %s53, 0
    %s55 = scalar_select %p54, %s53, 0
    %s56 = smul.u32 2, %s55
    %p57 = scmp.lt.s32.totalorder %s56, 1
    %s58 = scalar_select %p57, %s56, 1
    %s59 = smul.addr %s58, 8
    %s60 = scalar_lea.vmem %s3, %s59
    %s61 = sadd.s32 0, 0
    %p62 = scmp.lt.s32.totalorder %s61, 0
    %s63 = scalar_select %p62, %s61, 0
    %s64 = smul.u32 2, %s63
    %s65 = sadd.s32 0, 0
    %p66 = scmp.lt.s32.totalorder %s65, 0
    %s67 = scalar_select %p66, %s65, 0
    %s68 = smul.u32 2, %s67
    %p69 = scmp.lt.s32.totalorder %s68, 1
    %s70 = scalar_select %p69, %s68, 1
    %s71 = smul.addr %s70, 8
    %s72 = scalar_lea.vmem %s3, %s71
    %s73 = sadd.s32 0, 0
    %p74 = scmp.lt.s32.totalorder %s73, 0
    %s75 = scalar_select %p74, %s73, 0
    %s76 = smul.u32 2, %s75
    %p78 = scmp.eq.s32.totalorder 0, 0
    // Predicated region
    $region22: #{tpu_custom_call.1} parent=1 // pred_check
      %p79 = pneg %p78
    $region23: #{tpu_custom_call.1} parent=1 // pred_check_branch
      %81 = sbr.rel (%p79) target = $region25
    $region24: #{tpu_custom_call.1} parent=1 // pred_region
      %vm82 = vcmask 7168
      %83 = vst.msk [vmem:[#allocation2] sm:$0xff] %vm82, 0.0
      %84 = vst.msk [vmem:[#allocation2 + $0x8] sm:$0xff] %vm82, 0.0
      %85 = vst.msk [vmem:[#allocation3] sm:$0xff] %vm82, 0.0
      %86 = vst.msk [vmem:[#allocation3 + $0x8] sm:$0xff] %vm82, 0.0
    $region25: #{tpu_custom_call.1} parent=1 // pred_fallthru
      _
    %v87 = vld [vmem:[#allocation4] sm:$0xf]
    %v88 = vld [vmem:[#allocation4 + $0x4] sm:$0xf]
    %v89 = vld [vmem:[%s1] sm:$0xf]
    %v90 = vld [vmem:[%s1 + $0x4] sm:$0xf]
    %v91 = vld [vmem:[%s1 + $0x8] sm:$0xf]
    %v92 = vld [vmem:[%s1 + $0xc] sm:$0xf]
    %v93 = vld [vmem:[%s2] sm:$0x1]
    %v95 = vlaneseq
    %v96 = vshrl.u32 %v95, 7
    %v97 = vsub.s32 0, %v96
    %v98 = vrot.slane %v93, %v97
    %v102 = vunpack.c.l.b16 %v87
    %v103 = vunpack.c.l.b16 %v88
    %v104 = vpack.c.b16 %v103, %v102
    %v109 = vunpack.c.l.b16 %v89
    %v110 = vunpack.c.l.b16 %v90
    %v111 = vunpack.c.l.b16 %v91
    %v112 = vunpack.c.l.b16 %v92
    %v113 = vpack.c.b16 %v110, %v109
    %v114 = vpack.c.b16 %v112, %v111
    %vm117 = vcmask 261120
    %v119 = vsel %vm117, %v104, 0
    %121 = vmatprep.subr.bf16.mxu0 0
    %122 = vmatpush1.bf16.msra.mxu0 0
    %123 = vmatprep.subr.bf16.mxu0 0
    %124 = vmatpush1.bf16.msra.mxu0 0
    %125 = vmatprep.subr.bf16.mxu0 0
    %126 = vmatpush1.bf16.msra.mxu0 0
    %127 = vmatprep.subr.bf16.mxu0 0
    %128 = vmatpush1.bf16.msra.mxu0 0
    %129 = vmatprep.subr.bf16.mxu0 0
    %130 = vmatpush1.bf16.msra.mxu0 0
    %131 = vmatprep.subr.bf16.mxu0 0
    %132 = vmatpush1.bf16.msra.mxu0 0
    %133 = vmatprep.subr.bf16.mxu0 0
    %134 = vmatpush1.bf16.msra.mxu0 %v114
    %135 = vmatprep.subr.bf16.mxu0 0
    %136 = vmatpush1.bf16.msra.mxu0 %v113
    %137 = vmatprep.subr.bf16.mxu0 0
    %138 = vmatpush2.bf16.msra.mxu0 0
    %139 = vmatprep.subr.bf16.mxu0 0
    %140 = vmatpush2.bf16.msra.mxu0 0
    %141 = vmatprep.subr.bf16.mxu0 0
    %142 = vmatpush2.bf16.msra.mxu0 0
    %143 = vmatprep.subr.bf16.mxu0 0
    %144 = vmatpush2.bf16.msra.mxu0 0
    %145 = vmatprep.subr.bf16.mxu0 0
    %146 = vmatpush2.bf16.msra.mxu0 0
    %147 = vmatprep.subr.bf16.mxu0 0
    %148 = vmatpush2.bf16.msra.mxu0 0
    %149 = vmatprep.subr.bf16.mxu0 0
    %150 = vmatpush2.bf16.msra.mxu0 0
    %151 = vmatprep.subr.bf16.mxu0 0
    %152 = vmatpush2.bf16.msra.mxu0 0
    %153 = vmatprep.mubr.bf16.mxu0 0
    %154 = vmatmul.mubr.bf16.gmra.mxu0 %v119
    %v155 = vpop.f32.mrf.mxu0
    %v156 = vadd.f32 %v98, %v155
    %v157 = vpop.f32.mrf.mxu0
    %v158 = vpop.f32.mrf.mxu0
    %v159 = vadd.f32 %v98, %v158
    %v160 = vpop.f32.mrf.mxu0
    %161 = vdwg.mxu0
    %v162 = vld [vmem:[%s72] sm:$0xff]
    %v163 = vld [vmem:[%s72 + $0x8] sm:$0xff]
    %v164 = vlaneseq
    %v165 = vand.u32 %v164, 127
    %166 = vset.pattern.permute.xlu0 0
    %167 = vperm.xlu0 %166, %v162
    %v168 = vpop.permute.xlu0 %167
    %169 = vset.pattern.permute.xlu0 0
    %170 = vperm.xlu0 %169, %v163
    %v171 = vpop.permute.xlu0 %170
    %vm172 = vcmp.eq.s32.totalorder %v165, %v168
    %vm173 = vcmp.eq.s32.totalorder %v165, %v171
    %s174 = sadd.s32 0, 0
    %s175 = smul.u32 %s174, 16
    %v176 = vlaneseq
    %v177 = vshrl.u32 %v176, 7
    %v178 = vadd.s32 %v177, 8
    %v179 = vstv %s175
    %v180 = vadd.s32 %v179, %v177
    %v181 = vadd.s32 %v179, %v178
    %vm182 = vcmp.lt.s32.totalorder %v180, 16
    %vm183 = vcmp.lt.s32.totalorder %v181, 16
    %184 = vmax.xlane.f32.xlu0 %v156
    %v185 = vpop.xlane.xlu0 %184
    %186 = vmax.xlane.f32.xlu0 %v159
    %v187 = vpop.xlane.xlu0 %186
    %v188 = vsub.f32 %v156, %v185
    %v189 = vsub.f32 %v159, %v187
    %v190 = vmul.f32 %v188, 1.442695
    %v191 = vpow.pop %v190
    %v192 = vmul.f32 %v189, 1.442695
    %v193 = vpow.pop %v192
    %194 = vadd.xlane.f32.xlu0 %v191
    %v195 = vpop.xlane.xlu0 %194
    %196 = vadd.xlane.f32.xlu0 %v193
    %v197 = vpop.xlane.xlu0 %196
    %v198 = vlog2.pop %v195
    %v199 = vmul.f32 %v198, 0.6931472
    %v200 = vlog2.pop %v197
    %v201 = vmul.f32 %v200, 0.6931472
    %v202 = vsel %vm172, %v188, 0.0
    %v203 = vsel %vm173, %v189, 0.0
    %204 = vadd.xlane.f32.xlu0 %v202
    %v205 = vpop.xlane.xlu0 %204
    %206 = vadd.xlane.f32.xlu0 %v203
    %v207 = vpop.xlane.xlu0 %206
    %v208 = vsub.f32 %v199, %v205
    %v209 = vsub.f32 %v201, %v207
    %vm210 = vcmp.ge.f32.partialorder %v205, 0.0
    %vm211 = vcmp.ge.f32.partialorder %v207, 0.0
    %v212 = vld [vmem:[#allocation2] sm:$0xff]
    %v213 = vld [vmem:[#allocation2 + $0x8] sm:$0xff]
    %v214 = vsel %vm182, %v208, 0.0
    %v215 = vsel %vm183, %v209, 0.0
    %v216 = vadd.f32 %v212, %v214
    %v217 = vadd.f32 %v213, %v215
    %vm218 = vcmask 7168
    %219 = vst.msk [vmem:[#allocation2] sm:$0xff] %vm218, %v216
    %220 = vst.msk [vmem:[#allocation2 + $0x8] sm:$0xff] %vm218, %v217
    %v221 = vld [vmem:[#allocation3] sm:$0xff]
    %v222 = vld [vmem:[#allocation3 + $0x8] sm:$0xff]
    %vm223 = vmand %vm182, %vm210
    %vm224 = vmand %vm183, %vm211
    %v225 = vsel %vm223, 1.0, 0.0
    %v226 = vsel %vm224, 1.0, 0.0
    %v227 = vadd.f32 %v221, %v225
    %v228 = vadd.f32 %v222, %v226
    %229 = vst.msk [vmem:[#allocation3] sm:$0xff] %vm218, %v227
    %230 = vst.msk [vmem:[#allocation3 + $0x8] sm:$0xff] %vm218, %v228
    // Predicated region
    $region26: #{tpu_custom_call.1} parent=1 // pred_check
      %p231 = pneg %p78
    $region27: #{tpu_custom_call.1} parent=1 // pred_check_branch
      %233 = sbr.rel (%p231) target = $region29
    $region28: #{tpu_custom_call.1} parent=1 // pred_region
      %v234 = vld [vmem:[#allocation2] sm:$0xff]
      %v235 = vld [vmem:[#allocation2 + $0x8] sm:$0xff]
      %v236 = vsel %vm218, %v234, 0.0
      %v237 = vsel %vm218, %v235, 0.0
      %v238 = vadd.f32 %v236, %v237
      %239 = vadd.xlane.f32.xlu0 %v238
      %v240 = vpop.xlane.xlu0 %239
      %v241 = vrot.slane %v240, 4
      %v242 = vadd.f32 %v240, %v241
      %v243 = vrot.slane %v242, 2
      %v244 = vadd.f32 %v242, %v243
      %v245 = vrot.slane %v244, 1
      %v246 = vadd.f32 %v244, %v245
      %s247 = vtos %v246
      %v248 = vstv %s247
      %249 = vst [vmem:[#allocation7] sm:$0x1] %v248
      %v250 = vld [vmem:[#allocation3] sm:$0xff]
      %v251 = vld [vmem:[#allocation3 + $0x8] sm:$0xff]
      %v252 = vsel %vm218, %v250, 0.0
      %v253 = vsel %vm218, %v251, 0.0
      %v254 = vadd.f32 %v252, %v253
      %255 = vadd.xlane.f32.xlu0 %v254
      %v256 = vpop.xlane.xlu0 %255
      %v257 = vrot.slane %v256, 4
      %v258 = vadd.f32 %v256, %v257
      %v259 = vrot.slane %v258, 2
      %v260 = vadd.f32 %v258, %v259
      %v261 = vrot.slane %v260, 1
      %v262 = vadd.f32 %v260, %v261
      %s263 = vtos %v262
      %v264 = vstv %s263
      %265 = vst [vmem:[#allocation8] sm:$0x1] %v264
    $region29: #{tpu_custom_call.1} parent=1 // pred_fallthru
      _
    // Predicated region
    $region30: #{tpu_custom_call.1} parent=1 // pred_check
      _
    $region31: #{tpu_custom_call.1} parent=1 // pred_check_branch
      %267 = sbr.rel (0) target = $region33
    $region32: #{tpu_custom_call.1} parent=1 // pred_region
      %s269 = ssub.s32 16, 16
      %270 = vsyncadd [#allocation6], %s269
      %s272 = sshll.u32 [#allocation7], 4
      %s273 = int_to_ptr.vmem [resolvable:$true] %s272
      %275 = dma.vmem_to_hbm [thread:$0]  %s273, 16, %s4, [#allocation6]
    $region33: #{tpu_custom_call.1} parent=1 // pred_fallthru
      _
    // Predicated region
    $region34: #{tpu_custom_call.1} parent=1 // pred_check
      _
    $region35: #{tpu_custom_call.1} parent=1 // pred_check_branch
      %277 = sbr.rel (0) target = $region37
    $region36: #{tpu_custom_call.1} parent=1 // pred_region
      %s279 = ssub.s32 16, 16
      %280 = vsyncadd [#allocation9], %s279
      %s282 = sshll.u32 [#allocation8], 4
      %s283 = int_to_ptr.vmem [resolvable:$true] %s282
      %285 = dma.vmem_to_hbm [thread:$0]  %s283, 16, %s5, [#allocation9]
    $region37: #{tpu_custom_call.1} parent=1 // pred_fallthru
      _
    // Predicated region
    $region38: #{tpu_custom_call.1} parent=1 // pred_check
      _
    $region39: #{tpu_custom_call.1} parent=1 // pred_check_branch
      %287 = sbr.rel (0) target = $region41
    $region40: #{tpu_custom_call.1} parent=1 // pred_region
      %288 = dma.done [#allocation6], 16
    $region41: #{tpu_custom_call.1} parent=1 // pred_fallthru
      _
    // Predicated region
    $region42: #{tpu_custom_call.1} parent=1 // pred_check
      _
    $region43: #{tpu_custom_call.1} parent=1 // pred_check_branch
      %290 = sbr.rel (0) target = $region45
    $region44: #{tpu_custom_call.1} parent=1 // pred_region
      %291 = dma.done [#allocation9], 16
    $region45: #{tpu_custom_call.1} parent=1 // pred_fallthru
      _
    %292 = vsyncpa [#allocation5], 1
    %293 = vsyncpa [#allocation6], 1
    %294 = vsyncpa [#allocation9], 1

// kernel: tpu_custom_call.1
$region0: #{tpu_custom_call.1}
  #allocation0 [shape = 'u32[]', space=smem, size = 0x4, offset = 0x4, fixed_abs, tag = 'smem constant byte address 0x4 - core index']
  #allocation1 [shape = 'u32[144,128]{1,0:T(1,128)}', space=vmem, size = 0x12000, scoped, tag = 'internal scratch']
  #allocation2 [shape = 'f32[16,1]{1,0:T(8,128)}', space=vmem, size = 0x2000, scoped, tag = 'scratch operand']
  #allocation3 [shape = 'f32[16,1]{1,0:T(8,128)}', space=vmem, size = 0x2000, scoped, tag = 'scratch operand']
  %s0 = inlined_call_operand.hbm [shape: bf16[16,32], index: 0, kind: input, shape index: {}]
  %s1 = inlined_call_operand.vmem [shape: bf16[32,128], index: 1, kind: input, shape index: {}]
  %s2 = inlined_call_operand.vmem [shape: f32[1,128], index: 2, kind: input, shape index: {}]
  %s3 = inlined_call_operand.vmem [shape: s32[16,1], index: 3, kind: input, shape index: {}]
  %s4 = inlined_call_operand.hbm [shape: f32[1,1,128], index: 4, kind: output, shape index: {0}]
  %s5 = inlined_call_operand.hbm [shape: f32[1,1,128], index: 5, kind: output, shape index: {1}]
  %6 = xla_tuple %s4, %s5
  %s7 = sld [smem:[#allocation0]]
  $region46: #{tpu_custom_call.1} parent=0
    _
  %s9 = ssub.s32 1, %s7
  %s10 = scalar_select 0, %s9, %s7
  $region1: #{tpu_custom_call.1} parent=0
    #allocation4 [shape = 'u8[4096]{0}', space=vmem, size = 0x1000, scoped, tag = 'input window, operand 0, single buffered']
    #allocation5 [shape = 's32[1]{0}', space=sflag, size = 0x4, scoped, tag = 'scoped memory for tpu_custom_call.1']
    #allocation6 [shape = 's32[1]{0}', space=sflag, size = 0x4, scoped, tag = 'scoped memory for tpu_custom_call.1']
    #allocation7 [shape = 'u8[512]{0}', space=vmem, size = 0x400, scoped, tag = 'output window, operand 0, single buffered']
    #allocation8 [shape = 'u8[512]{0}', space=vmem, size = 0x400, scoped, tag = 'output window, operand 1, single buffered']
    #allocation9 [shape = 's32[1]{0}', space=sflag, size = 0x4, scoped, tag = 'scoped memory for tpu_custom_call.1']
    %11 = vsyncpa [#allocation5], 0
    %12 = vsyncpa [#allocation6], 0
    %13 = vsyncpa [#allocation9], 0
    // Predicated region
    $region2: #{tpu_custom_call.1} parent=1 // pred_check
      _
    $region3: #{tpu_custom_call.1} parent=1 // pred_check_branch
      %15 = sbr.rel (0) target = $region5
    $region4: #{tpu_custom_call.1} parent=1 // pred_region
      %s16 = sadd.s32 0, 0
      %p17 = scmp.lt.s32.totalorder %s16, 0
      %s18 = scalar_select %p17, %s16, 0
      %s19 = smul.u32 2, %s18
      %s21 = ssub.s32 128, 128
      %22 = vsyncadd [#allocation5], %s21
      %s23 = smul.addr %s19, 64
      %s24 = scalar_lea.hbm %s0, %s23
      %s25 = sshll.u32 [#allocation4], 4
      %s26 = int_to_ptr.vmem [resolvable:$true] %s25
      %31 = dma.hbm_to_vmem [thread:$0]  %s24, 128, %s26, [#allocation5], 64, 64, 4
    $region5: #{tpu_custom_call.1} parent=1 // pred_fallthru
      _
    // Predicated region
    $region6: #{tpu_custom_call.1} parent=1 // pred_check
      _
    $region7: #{tpu_custom_call.1} parent=1 // pred_check_branch
      %33 = sbr.rel (0) target = $region9
    $region8: #{tpu_custom_call.1} parent=1 // pred_region
      _
    $region9: #{tpu_custom_call.1} parent=1 // pred_fallthru
      _
    // Predicated region
    $region10: #{tpu_custom_call.1} parent=1 // pred_check
      _
    $region11: #{tpu_custom_call.1} parent=1 // pred_check_branch
      %35 = sbr.rel (0) target = $region13
    $region12: #{tpu_custom_call.1} parent=1 // pred_region
      _
    $region13: #{tpu_custom_call.1} parent=1 // pred_fallthru
      _
    // Predicated region
    $region14: #{tpu_custom_call.1} parent=1 // pred_check
      _
    $region15: #{tpu_custom_call.1} parent=1 // pred_check_branch
      %37 = sbr.rel (0) target = $region17
    $region16: #{tpu_custom_call.1} parent=1 // pred_region
      %s38 = sadd.s32 0, 0
      %p39 = scmp.lt.s32.totalorder %s38, 0
      %s40 = scalar_select %p39, %s38, 0
      %s41 = smul.u32 2, %s40
      %p42 = scmp.lt.s32.totalorder %s41, 1
      %s43 = scalar_select %p42, %s41, 1
      %s44 = smul.addr %s43, 8
      %s45 = scalar_lea.vmem %s3, %s44
      %s46 = sadd.s32 0, 0
      %p47 = scmp.lt.s32.totalorder %s46, 0
      %s48 = scalar_select %p47, %s46, 0
      %s49 = smul.u32 2, %s48
    $region17: #{tpu_custom_call.1} parent=1 // pred_fallthru
      _
    // Predicated region
    $region18: #{tpu_custom_call.1} parent=1 // pred_check
      _
    $region19: #{tpu_custom_call.1} parent=1 // pred_check_branch
      %51 = sbr.rel (0) target = $region21
    $region20: #{tpu_custom_call.1} parent=1 // pred_region
      %52 = dma.done [#allocation5], 128
    $region21: #{tpu_custom_call.1} parent=1 // pred_fallthru
      _
    %s53 = sadd.s32 0, 0
    %p54 = scmp.lt.s32.totalorder %s53, 0
    %s55 = scalar_select %p54, %s53, 0
    %s56 = smul.u32 2, %s55
    %p57 = scmp.lt.s32.totalorder %s56, 1
    %s58 = scalar_select %p57, %s56, 1
    %s59 = smul.addr %s58, 8
    %s60 = scalar_lea.vmem %s3, %s59
    %s61 = sadd.s32 0, 0
    %p62 = scmp.lt.s32.totalorder %s61, 0
    %s63 = scalar_select %p62, %s61, 0
    %s64 = smul.u32 2, %s63
    %s65 = sadd.s32 0, 0
    %p66 = scmp.lt.s32.totalorder %s65, 0
    %s67 = scalar_select %p66, %s65, 0
    %s68 = smul.u32 2, %s67
    %p69 = scmp.lt.s32.totalorder %s68, 1
    %s70 = scalar_select %p69, %s68, 1
    %s71 = smul.addr %s70, 8
    %s72 = scalar_lea.vmem %s3, %s71
    %s73 = sadd.s32 0, 0
    %p74 = scmp.lt.s32.totalorder %s73, 0
    %s75 = scalar_select %p74, %s73, 0
    %s76 = smul.u32 2, %s75
    %p78 = scmp.eq.s32.totalorder 0, 0
    // Predicated region
    $region22: #{tpu_custom_call.1} parent=1 // pred_check
      %p79 = pneg %p78
    $region23: #{tpu_custom_call.1} parent=1 // pred_check_branch
      %81 = sbr.rel (%p79) target = $region25
    $region24: #{tpu_custom_call.1} parent=1 // pred_region
      %vm82 = vcmask 7168
      %83 = vst.msk [vmem:[#allocation2] sm:$0xff] %vm82, 0.0
      %84 = vst.msk [vmem:[#allocation2 + $0x8] sm:$0xff] %vm82, 0.0
      %85 = vst.msk [vmem:[#allocation3] sm:$0xff] %vm82, 0.0
      %86 = vst.msk [vmem:[#allocation3 + $0x8] sm:$0xff] %vm82, 0.0
    $region25: #{tpu_custom_call.1} parent=1 // pred_fallthru
      _
    %v87 = vld [vmem:[#allocation4] sm:$0xf]
    %v88 = vld [vmem:[#allocation4 + $0x4] sm:$0xf]
    %v89 = vld [vmem:[%s1] sm:$0xf]
    %v90 = vld [vmem:[%s1 + $0x4] sm:$0xf]
    %v91 = vld [vmem:[%s1 + $0x8] sm:$0xf]
    %v92 = vld [vmem:[%s1 + $0xc] sm:$0xf]
    %v93 = vld [vmem:[%s2] sm:$0x1]
    %v95 = vlaneseq
    %v96 = vshrl.u32 %v95, 7
    %v97 = vsub.s32 0, %v96
    %v98 = vrot.slane %v93, %v97
    %v102 = vunpack.c.l.b16 %v87
    %v103 = vunpack.c.l.b16 %v88
    %v104 = vpack.c.b16 %v103, %v102
    %v109 = vunpack.c.l.b16 %v89
    %v110 = vunpack.c.l.b16 %v90
    %v111 = vunpack.c.l.b16 %v91
    %v112 = vunpack.c.l.b16 %v92
    %v113 = vpack.c.b16 %v110, %v109
    %v114 = vpack.c.b16 %v112, %v111
    %vm117 = vcmask 261120
    %v119 = vsel %vm117, %v104, 0
    %121 = vmatprep.subr.bf16.mxu0 0
    %122 = vmatpush1.bf16.msra.mxu0 0
    %123 = vmatprep.subr.bf16.mxu0 0
    %124 = vmatpush1.bf16.msra.mxu0 0
    %125 = vmatprep.subr.bf16.mxu0 0
    %126 = vmatpush1.bf16.msra.mxu0 0
    %127 = vmatprep.subr.bf16.mxu0 0
    %128 = vmatpush1.bf16.msra.mxu0 0
    %129 = vmatprep.subr.bf16.mxu0 0
    %130 = vmatpush1.bf16.msra.mxu0 0
    %131 = vmatprep.subr.bf16.mxu0 0
    %132 = vmatpush1.bf16.msra.mxu0 0
    %133 = vmatprep.subr.bf16.mxu0 0
    %134 = vmatpush1.bf16.msra.mxu0 %v114
    %135 = vmatprep.subr.bf16.mxu0 0
    %136 = vmatpush1.bf16.msra.mxu0 %v113
    %137 = vmatprep.subr.bf16.mxu0 0
    %138 = vmatpush2.bf16.msra.mxu0 0
    %139 = vmatprep.subr.bf16.mxu0 0
    %140 = vmatpush2.bf16.msra.mxu0 0
    %141 = vmatprep.subr.bf16.mxu0 0
    %142 = vmatpush2.bf16.msra.mxu0 0
    %143 = vmatprep.subr.bf16.mxu0 0
    %144 = vmatpush2.bf16.msra.mxu0 0
    %145 = vmatprep.subr.bf16.mxu0 0
    %146 = vmatpush2.bf16.msra.mxu0 0
    %147 = vmatprep.subr.bf16.mxu0 0
    %148 = vmatpush2.bf16.msra.mxu0 0
    %149 = vmatprep.subr.bf16.mxu0 0
    %150 = vmatpush2.bf16.msra.mxu0 0
    %151 = vmatprep.subr.bf16.mxu0 0
    %152 = vmatpush2.bf16.msra.mxu0 0
    %153 = vmatprep.mubr.bf16.mxu0 0
    %154 = vmatmul.mubr.bf16.gmra.mxu0 %v119
    %v155 = vpop.f32.mrf.mxu0
    %v156 = vadd.f32 %v98, %v155
    %v157 = vpop.f32.mrf.mxu0
    %v158 = vpop.f32.mrf.mxu0
    %v159 = vadd.f32 %v98, %v158
    %v160 = vpop.f32.mrf.mxu0
    %161 = vdwg.mxu0
    %v162 = vld [vmem:[%s72] sm:$0xff]
    %v163 = vld [vmem:[%s72 + $0x8] sm:$0xff]
    %v164 = vlaneseq
    %v165 = vand.u32 %v164, 127
    %166 = vset.pattern.permute.xlu0 0
    %167 = vperm.xlu0 %166, %v162
    %v168 = vpop.permute.xlu0 %167
    %169 = vset.pattern.permute.xlu0 0
    %170 = vperm.xlu0 %169, %v163
    %v171 = vpop.permute.xlu0 %170
    %vm172 = vcmp.eq.s32.totalorder %v165, %v168
    %vm173 = vcmp.eq.s32.totalorder %v165, %v171
    %s174 = sadd.s32 0, 0
    %s175 = smul.u32 %s174, 16
    %v176 = vlaneseq
    %v177 = vshrl.u32 %v176, 7
    %v178 = vadd.s32 %v177, 8
    %v179 = vstv %s175
    %v180 = vadd.s32 %v179, %v177
    %v181 = vadd.s32 %v179, %v178
    %vm182 = vcmp.lt.s32.totalorder %v180, 16
    %vm183 = vcmp.lt.s32.totalorder %v181, 16
    %184 = vmax.xlane.f32.xlu0 %v156
    %v185 = vpop.xlane.xlu0 %184
    %186 = vmax.xlane.f32.xlu0 %v159
    %v187 = vpop.xlane.xlu0 %186
    %v188 = vsub.f32 %v156, %v185
    %v189 = vsub.f32 %v159, %v187
    %v190 = vmul.f32 %v188, 1.442695
    %v191 = vpow.pop %v190
    %v192 = vmul.f32 %v189, 1.442695
    %v193 = vpow.pop %v192
    %194 = vadd.xlane.f32.xlu0 %v191
    %v195 = vpop.xlane.xlu0 %194
    %196 = vadd.xlane.f32.xlu0 %v193
    %v197 = vpop.xlane.xlu0 %196
    %v198 = vlog2.pop %v195
    %v199 = vmul.f32 %v198, 0.6931472
    %v200 = vlog2.pop %v197
    %v201 = vmul.f32 %v200, 0.6931472
    %v202 = vsel %vm172, %v188, 0.0
    %v203 = vsel %vm173, %v189, 0.0
    %204 = vadd.xlane.f32.xlu0 %v202
    %v205 = vpop.xlane.xlu0 %204
    %206 = vadd.xlane.f32.xlu0 %v203
    %v207 = vpop.xlane.xlu0 %206
    %v208 = vsub.f32 %v199, %v205
    %v209 = vsub.f32 %v201, %v207
    %vm210 = vcmp.ge.f32.partialorder %v205, 0.0
    %vm211 = vcmp.ge.f32.partialorder %v207, 0.0
    %v212 = vld [vmem:[#allocation2] sm:$0xff]
    %v213 = vld [vmem:[#allocation2 + $0x8] sm:$0xff]
    %v214 = vsel %vm182, %v208, 0.0
    %v215 = vsel %vm183, %v209, 0.0
    %v216 = vadd.f32 %v212, %v214
    %v217 = vadd.f32 %v213, %v215
    %vm218 = vcmask 7168
    %219 = vst.msk [vmem:[#allocation2] sm:$0xff] %vm218, %v216
    %220 = vst.msk [vmem:[#allocation2 + $0x8] sm:$0xff] %vm218, %v217
    %v221 = vld [vmem:[#allocation3] sm:$0xff]
    %v222 = vld [vmem:[#allocation3 + $0x8] sm:$0xff]
    %vm223 = vmand %vm182, %vm210
    %vm224 = vmand %vm183, %vm211
    %v225 = vsel %vm223, 1.0, 0.0
    %v226 = vsel %vm224, 1.0, 0.0
    %v227 = vadd.f32 %v221, %v225
    %v228 = vadd.f32 %v222, %v226
    %229 = vst.msk [vmem:[#allocation3] sm:$0xff] %vm218, %v227
    %230 = vst.msk [vmem:[#allocation3 + $0x8] sm:$0xff] %vm218, %v228
    // Predicated region
    $region26: #{tpu_custom_call.1} parent=1 // pred_check
      %p231 = pneg %p78
    $region27: #{tpu_custom_call.1} parent=1 // pred_check_branch
      %233 = sbr.rel (%p231) target = $region29
    $region28: #{tpu_custom_call.1} parent=1 // pred_region
      %v234 = vld [vmem:[#allocation2] sm:$0xff]
      %v235 = vld [vmem:[#allocation2 + $0x8] sm:$0xff]
      %v236 = vsel %vm218, %v234, 0.0
      %v237 = vsel %vm218, %v235, 0.0
      %v238 = vadd.f32 %v236, %v237
      %239 = vadd.xlane.f32.xlu0 %v238
      %v240 = vpop.xlane.xlu0 %239
      %v241 = vrot.slane %v240, 4
      %v242 = vadd.f32 %v240, %v241
      %v243 = vrot.slane %v242, 2
      %v244 = vadd.f32 %v242, %v243
      %v245 = vrot.slane %v244, 1
      %v246 = vadd.f32 %v244, %v245
      %s247 = vtos %v246
      %v248 = vstv %s247
      %249 = vst [vmem:[#allocation7] sm:$0x1] %v248
      %v250 = vld [vmem:[#allocation3] sm:$0xff]
      %v251 = vld [vmem:[#allocation3 + $0x8] sm:$0xff]
      %v252 = vsel %vm218, %v250, 0.0
      %v253 = vsel %vm218, %v251, 0.0
      %v254 = vadd.f32 %v252, %v253
      %255 = vadd.xlane.f32.xlu0 %v254
      %v256 = vpop.xlane.xlu0 %255
      %v257 = vrot.slane %v256, 4
      %v258 = vadd.f32 %v256, %v257
      %v259 = vrot.slane %v258, 2
      %v260 = vadd.f32 %v258, %v259
      %v261 = vrot.slane %v260, 1
      %v262 = vadd.f32 %v260, %v261
      %s263 = vtos %v262
      %v264 = vstv %s263
      %265 = vst [vmem:[#allocation8] sm:$0x1] %v264
    $region29: #{tpu_custom_call.1} parent=1 // pred_fallthru
      _
    // Predicated region
    $region30: #{tpu_custom_call.1} parent=1 // pred_check
      _
    $region31: #{tpu_custom_call.1} parent=1 // pred_check_branch
      %267 = sbr.rel (0) target = $region33
    $region32: #{tpu_custom_call.1} parent=1 // pred_region
      %s269 = ssub.s32 16, 16
      %270 = vsyncadd [#allocation6], %s269
      %s272 = sshll.u32 [#allocation7], 4
      %s273 = int_to_ptr.vmem [resolvable:$true] %s272
      %275 = dma.vmem_to_hbm [thread:$0]  %s273, 16, %s4, [#allocation6]
    $region33: #{tpu_custom_call.1} parent=1 // pred_fallthru
      _
    // Predicated region
    $region34: #{tpu_custom_call.1} parent=1 // pred_check
      _
    $region35: #{tpu_custom_call.1} parent=1 // pred_check_branch
      %277 = sbr.rel (0) target = $region37
    $region36: #{tpu_custom_call.1} parent=1 // pred_region
      %s279 = ssub.s32 16, 16
      %280 = vsyncadd [#allocation9], %s279
      %s282 = sshll.u32 [#allocation8], 4
      %s283 = int_to_ptr.vmem [resolvable:$true] %s282
      %285 = dma.vmem_to_hbm [thread:$0]  %s283, 16, %s5, [#allocation9]
    $region37: #{tpu_custom_call.1} parent=1 // pred_fallthru
      _
    // Predicated region
    $region38: #{tpu_custom_call.1} parent=1 // pred_check
      _
    $region39: #{tpu_custom_call.1} parent=1 // pred_check_branch
      %287 = sbr.rel (0) target = $region41
    $region40: #{tpu_custom_call.1} parent=1 // pred_region
      %288 = dma.done [#allocation6], 16
    $region41: #{tpu_custom_call.1} parent=1 // pred_fallthru
      _
    // Predicated region
    $region42: #{tpu_custom_call.1} parent=1 // pred_check
      _
    $region43: #{tpu_custom_call.1} parent=1 // pred_check_branch
      %290 = sbr.rel (0) target = $region45
    $region44: #{tpu_custom_call.1} parent=1 // pred_region
      %291 = dma.done [#allocation9], 16
    $region45: #{tpu_custom_call.1} parent=1 // pred_fallthru
      _
    %292 = vsyncpa [#allocation5], 1
    %293 = vsyncpa [#allocation6], 1
    %294 = vsyncpa [#allocation9], 1

</llo_original>
